<compile_context>
chip_gen: v5e
topology: v5e:2x2
jax: 0.10.0
libtpu: 0.0.40
codegen_flags: <defaults>
</compile_context>

<pallas_src>
import jax
import jax.numpy as jnp
from jax.experimental import pallas as pl
from jax.experimental.pallas import tpu as pltpu


def _round_up(x: int, m: int) -> int:
    return (x + m - 1) // m * m


def _cdiv(a: int, b: int) -> int:
    return (a + b - 1) // b


def _sublane_multiple(dtype) -> int:
    # Minimum sublane tile per dtype: 8 (f32), 16 (bf16), 32 (int8 / fp8).
    return max(8, 32 // jnp.dtype(dtype).itemsize)


def _pick_tiles(m: int, k: int, n: int, dtype):
    """Lane-dense tiles sized for operand reuse, shrunk for small problems."""
    sub = _sublane_multiple(dtype)
    tm = min(512, _round_up(m, sub))
    tn = min(512, _round_up(n, 128))

    # Collapse the K grid entirely for moderate K (single reduction block ->
    # no accumulator RMW, no K-loop overhead); otherwise stream 512-wide
    # chunks of K with an f32 VMEM accumulator.
    kp_full = _round_up(k, 128)
    tk = kp_full if kp_full <= 1024 else min(512, kp_full)

    # v7x megacore: keep >= 2 parallel (M or N) blocks when the problem allows
    # so the second TensorCore has work to shard.
    if _cdiv(m, tm) == 1 and _cdiv(n, tn) == 1:
        if m > 2 * sub:
            tm = _round_up(_cdiv(m, 2), sub)
        elif n > 256:
            tn = _round_up(_cdiv(n, 2), 128)
    return tm, tn, tk


def _mylinear_kernel(x_ref, w_ref, b_ref, o_ref, acc_ref):
    # grid = (M//tm, N//tn, K//tk); K (reduction) is the innermost axis.
    k = pl.program_id(2)

    @pl.when(k == 0)
    def _init():
        acc_ref[...] = jnp.zeros_like(acc_ref)

    # MXU matmul, f32 accumulation.
    acc_ref[...] += jnp.dot(x_ref[...], w_ref[...],
                            preferred_element_type=jnp.float32)

    # Epilogue once per (i, j) output tile: bias add + ReLU + cast + store.
    @pl.when(k == pl.num_programs(2) - 1)
    def _finalize():
        acc = acc_ref[...] + b_ref[...].astype(jnp.float32)
        o_ref[...] = jnp.maximum(acc, 0.0).astype(o_ref.dtype)


def _mylinear_kernel_single_k(x_ref, w_ref, b_ref, o_ref):
    # K fits in one block: no scratch accumulator, no K loop.
    acc = jnp.dot(x_ref[...], w_ref[...], preferred_element_type=jnp.float32)
    acc = acc + b_ref[...].astype(jnp.float32)
    o_ref[...] = jnp.maximum(acc, 0.0).astype(o_ref.dtype)


def mylinear_forward_pallas(x, weight, bias, *, input_dtype=None):
    """y = relu(x @ weight + bias) via a tiled Pallas TPU kernel.

    If `input_dtype` is set (e.g. jnp.bfloat16), X and W are cast to it before
    the kernel; accumulation, bias add and ReLU stay in f32 and the output
    keeps x's original dtype.
    """
    m, k = x.shape
    kw, n = weight.shape
    assert kw == k, "weight first dim must match x second dim"

    out_dtype = x.dtype
    if input_dtype is not None:
        x = x.astype(input_dtype)
        weight = weight.astype(input_dtype)
    compute_dtype = x.dtype

    tm, tn, tk = _pick_tiles(m, k, n, compute_dtype)
    kp = _round_up(k, tk)
    grid_m, grid_n, grid_k = _cdiv(m, tm), _cdiv(n, tn), kp // tk

    # Only K needs explicit zero padding (it feeds the reduction).  Ragged
    # M / N tails are handled by Pallas boundary masking: garbage rows / cols
    # of boundary input blocks only contribute to output rows / cols that are
    # never written back (out_shape is exactly (m, n)).
    xp = x if kp == k else jnp.pad(x, ((0, 0), (0, kp - k)))
    wp = weight if kp == k else jnp.pad(weight, ((0, kp - k), (0, 0)))

    # Bias is a tiny 1-D vector: pad it to full grid coverage (negligible
    # cost, avoids reading unspecified memory) and keep it in f32.
    nb = grid_n * tn
    bp = jnp.pad(bias.astype(jnp.float32), (0, nb - n)).reshape(1, nb)

    bytes_in = jnp.dtype(compute_dtype).itemsize
    bytes_out = jnp.dtype(out_dtype).itemsize

    # Double-buffered input / output tiles + f32 accumulator + bias, with 2x
    # headroom; clamp to 48 MiB so the same sizing is safe on v7x's 64 MiB
    # physical VMEM as well as v5e / v6e's 128 MiB.
    vmem_est = (2 * (tm * tk + tk * tn) * bytes_in
                + 2 * tm * tn * bytes_out
                + tm * tn * 4
                + 2 * tn * 4)
    vmem_limit = int(min(48 * 1024 * 1024,
                         max(32 * 1024 * 1024, 2 * vmem_est)))

    cost = pl.CostEstimate(
        flops=2 * m * k * n + 2 * m * n,
        transcendentals=0,
        bytes_accessed=(m * k + k * n) * bytes_in + n * 4 + m * n * bytes_out,
    )

    common = dict(
        out_shape=jax.ShapeDtypeStruct((m, n), out_dtype),
        grid=(grid_m, grid_n, grid_k),
        in_specs=[
            pl.BlockSpec((tm, tk), lambda i, j, kk: (i, kk)),
            pl.BlockSpec((tk, tn), lambda i, j, kk: (kk, j)),
            pl.BlockSpec((1, tn), lambda i, j, kk: (0, j)),
        ],
        out_specs=pl.BlockSpec((tm, tn), lambda i, j, kk: (i, j)),
        compiler_params=pltpu.CompilerParams(
            dimension_semantics=("parallel", "parallel", "arbitrary"),
            vmem_limit_bytes=vmem_limit),
        cost_estimate=cost,
    )

    if grid_k == 1:
        return pl.pallas_call(_mylinear_kernel_single_k, **common)(xp, wp, bp)

    return pl.pallas_call(
        _mylinear_kernel,
        scratch_shapes=[pltpu.VMEM((tm, tn), jnp.float32)],
        **common,
    )(xp, wp, bp)


def mylinear_forward(x, weight, bias, *, input_dtype=None):
    """Shape-gated entry point: tiny problems use fused XLA (the pallas_call
    fixed cost dwarfs ~kFLOPs of work); everything else takes the Pallas
    kernel."""
    m, k = x.shape
    _, n = weight.shape
    if m * k * n < (1 << 21):   # ~2M MACs threshold
        out_dtype = x.dtype
        if input_dtype is not None:
            x = x.astype(input_dtype)
            weight = weight.astype(input_dtype)
        y = jnp.dot(x, weight, preferred_element_type=jnp.float32) + bias
        return jnp.maximum(y, 0.0).astype(out_dtype)
    return mylinear_forward_pallas(x, weight, bias, input_dtype=input_dtype)


if __name__ == "__main__":
    # ---- Module-spec shapes: X = randn(2, 20), MyLinear(20, 32) ----
    batch, in_num, out_num = 2, 20, 32
    kx, kw = jax.random.split(jax.random.PRNGKey(0))
    x = jax.random.normal(kx, (batch, in_num), dtype=jnp.float32)
    weight = jax.random.normal(kw, (in_num, out_num), dtype=jnp.float32)
    bias = jnp.zeros((out_num,), dtype=jnp.float32)

    y_ref = jnp.maximum(jnp.dot(x, weight) + bias, 0.0)

    # Run the Pallas kernel directly (even at this toy size) to verify it.
    y = jax.block_until_ready(mylinear_forward_pallas(x, weight, bias))
    assert y.shape == (batch, out_num)
    assert jnp.allclose(y, y_ref, atol=1e-5, rtol=1e-5)

    # Shape-gated wrapper (falls back to fused XLA at this size).
    y_gated = jax.block_until_ready(mylinear_forward(x, weight, bias))
    assert jnp.allclose(y_gated, y_ref, atol=1e-5, rtol=1e-5)

    # ---- A modest multi-tile shape exercising the real (M, N, K) grid
    #      (2 x 2 x 3), the f32 VMEM accumulator, the k==last epilogue and
    #      the unpadded ragged M / N boundary handling. ----
    M, K, N = 640, 1536, 640
    k1, k2, k3 = jax.random.split(jax.random.PRNGKey(1), 3)
    xb = jax.random.normal(k1, (M, K), dtype=jnp.float32)
    wb = jax.random.normal(k2, (K, N), dtype=jnp.float32)
    bb = jax.random.normal(k3, (N,), dtype=jnp.float32)

    yb = jax.block_until_ready(mylinear_forward_pallas(xb, wb, bb))
    yb_ref = jnp.maximum(jnp.dot(xb, wb) + bb, 0.0)
    assert yb.shape == (M, N)
    assert jnp.allclose(yb, yb_ref, atol=1e-2, rtol=1e-2)

    # ---- bf16-input path (f32 accumulation): exercises the 16-sublane tile
    #      rounding and the reduced-bandwidth operand option for v6e / v7x. ----
    yh = jax.block_until_ready(
        mylinear_forward_pallas(xb, wb, bb, input_dtype=jnp.bfloat16))
    yh_ref = jnp.maximum(
        jnp.dot(xb.astype(jnp.bfloat16), wb.astype(jnp.bfloat16),
                preferred_element_type=jnp.float32) + bb, 0.0)
    assert yh.dtype == xb.dtype
    assert jnp.allclose(yh, yh_ref, atol=1e-1, rtol=2e-2)

    print("KERNEL_OK")
</pallas_src>

<mosaic_0001>
module attributes {stable_mosaic.version = 11 : i64} {
  func.func @_mylinear_kernel_single_k(%arg0: i32, %arg1: i32, %arg2: i32, %arg3: memref<8x128xf32, #tpu.memory_space<vmem>>, %arg4: memref<128x128xf32, #tpu.memory_space<vmem>>, %arg5: memref<1x128xf32, #tpu.memory_space<vmem>>, %arg6: memref<8x128xf32, #tpu.memory_space<vmem>>) attributes {dimension_semantics = [#tpu.dimension_semantics<parallel>, #tpu.dimension_semantics<parallel>, #tpu.dimension_semantics<arbitrary>], iteration_bounds = array<i64: 1, 1, 1>, scalar_prefetch = 0 : i64, scratch_operands = 0 : i64, tpu.core_type = #tpu.core_type<tc>, window_params = [{transform_indices = @transform_0, window_bounds = array<i64: 8, 128>}, {transform_indices = @transform_1, window_bounds = array<i64: 128, 128>}, {transform_indices = @transform_2, window_bounds = array<i64: 1, 128>}, {transform_indices = @transform_3, window_bounds = array<i64: 8, 128>}]} {
    %c0 = arith.constant 0 : index
    %c0_0 = arith.constant 0 : index
    %0 = vector.load %arg3[%c0, %c0_0] : memref<8x128xf32, #tpu.memory_space<vmem>>, vector<8x128xf32>
    %c0_1 = arith.constant 0 : index
    %c0_2 = arith.constant 0 : index
    %1 = vector.load %arg4[%c0_1, %c0_2] : memref<128x128xf32, #tpu.memory_space<vmem>>, vector<128x128xf32>
    %cst = arith.constant dense<0.000000e+00> : vector<8x128xf32>
    %2 = tpu.matmul %0, %1, %cst {dimension_numbers = #tpu.dot_dimension_numbers<[1], [0], [0], [1], [0, 0, 1, 1], [], []>} : vector<8x128xf32>, vector<128x128xf32>, vector<8x128xf32> -> vector<8x128xf32>
    %c0_3 = arith.constant 0 : index
    %c0_4 = arith.constant 0 : index
    %3 = vector.load %arg5[%c0_3, %c0_4] : memref<1x128xf32, #tpu.memory_space<vmem>>, vector<1x128xf32>
    %4 = vector.broadcast %3 : vector<1x128xf32> to vector<8x128xf32>
    %5 = arith.addf %2, %4 : vector<8x128xf32>
    %cst_5 = arith.constant 0.000000e+00 : f32
    %6 = vector.broadcast %cst_5 : f32 to vector<8x128xf32>
    %7 = arith.maximumf %5, %6 : vector<8x128xf32>
    %c0_6 = arith.constant 0 : index
    %c0_7 = arith.constant 0 : index
    %8 = vector.load %arg6[%c0_6, %c0_7] : memref<8x128xf32, #tpu.memory_space<vmem>>, vector<8x128xf32>
    tpu.vector_store %arg6[%c0_6, %c0_7], %7 {strides = array<i32>} : memref<8x128xf32, #tpu.memory_space<vmem>>, vector<8x128xf32>,
    return
  }
  func.func @transform_0(%arg0: i32, %arg1: i32, %arg2: i32) -> (i32, i32) {
    %c0_i32 = arith.constant 0 : i32
    return %arg0, %arg2 : i32, i32
  }
  func.func @transform_1(%arg0: i32, %arg1: i32, %arg2: i32) -> (i32, i32) {
    %c0_i32 = arith.constant 0 : i32
    return %arg2, %arg1 : i32, i32
  }
  func.func @transform_2(%arg0: i32, %arg1: i32, %arg2: i32) -> (i32, i32) {
    %c0_i32 = arith.constant 0 : i32
    %c0_i32_0 = arith.constant 0 : i32
    return %c0_i32, %arg1 : i32, i32
  }
  func.func @transform_3(%arg0: i32, %arg1: i32, %arg2: i32) -> (i32, i32) {
    %c0_i32 = arith.constant 0 : i32
    return %arg0, %arg1 : i32, i32
  }
}

</mosaic_0001>

<llo_original>
// kernel: tpu_custom_call.1
$region0: #{tpu_custom_call.1}
  #allocation0 [shape = 'u32[]', space=smem, size = 0x4, offset = 0x4, fixed_abs, tag = 'smem constant byte address 0x4 - core index']
  #allocation1 [shape = 'u32[72,128]{1,0:T(1,128)}', space=vmem, size = 0x9000, scoped, tag = 'internal scratch']
  %s0 = inlined_call_operand.vmem [shape: f32[2,128], index: 0, kind: input, shape index: {}]
  %s1 = inlined_call_operand.vmem [shape: f32[128,32], index: 1, kind: input, shape index: {}]
  %s2 = inlined_call_operand.vmem [shape: f32[1,128], index: 2, kind: input, shape index: {}]
  %s3 = inlined_call_operand.hbm [shape: f32[2,32], index: 3, kind: output, shape index: {}]
  %s4 = sld [smem:[#allocation0]]
  $region22: #{tpu_custom_call.1} parent=0
    _
  %s6 = ssub.s32 1, %s4
  %s7 = scalar_select 0, %s6, %s4
  $region1: #{tpu_custom_call.1} parent=0
    #allocation2 [shape = 'u8[4096]{0}', space=vmem, size = 0x1000, scoped, tag = 'output window, operand 0, single buffered']
    #allocation3 [shape = 's32[1]{0}', space=sflag, size = 0x4, scoped, tag = 'scoped memory for tpu_custom_call.1']
    %8 = vsyncpa [#allocation3], 0
    // Predicated region
    $region2: #{tpu_custom_call.1} parent=1 // pred_check
      _
    $region3: #{tpu_custom_call.1} parent=1 // pred_check_branch
      %10 = sbr.rel (0) target = $region5
    $region4: #{tpu_custom_call.1} parent=1 // pred_region
      _
    $region5: #{tpu_custom_call.1} parent=1 // pred_fallthru
      _
    // Predicated region
    $region6: #{tpu_custom_call.1} parent=1 // pred_check
      _
    $region7: #{tpu_custom_call.1} parent=1 // pred_check_branch
      %12 = sbr.rel (0) target = $region9
    $region8: #{tpu_custom_call.1} parent=1 // pred_region
      _
    $region9: #{tpu_custom_call.1} parent=1 // pred_fallthru
      _
    // Predicated region
    $region10: #{tpu_custom_call.1} parent=1 // pred_check
      _
    $region11: #{tpu_custom_call.1} parent=1 // pred_check_branch
      %14 = sbr.rel (0) target = $region13
    $region12: #{tpu_custom_call.1} parent=1 // pred_region
      _
    $region13: #{tpu_custom_call.1} parent=1 // pred_fallthru
      _
    %v15 = vld [vmem:[%s0] sm:$0xff]
    %v16 = vld [vmem:[%s1] sm:$0xff]
    %v17 = vld [vmem:[%s1 + $0x8] sm:$0xff]
    %v18 = vld [vmem:[%s1 + $0x10] sm:$0xff]
    %v19 = vld [vmem:[%s1 + $0x18] sm:$0xff]
    %v20 = vld [vmem:[%s1 + $0x20] sm:$0xff]
    %v21 = vld [vmem:[%s1 + $0x28] sm:$0xff]
    %v22 = vld [vmem:[%s1 + $0x30] sm:$0xff]
    %v23 = vld [vmem:[%s1 + $0x38] sm:$0xff]
    %v24 = vld [vmem:[%s1 + $0x40] sm:$0xff]
    %v25 = vld [vmem:[%s1 + $0x48] sm:$0xff]
    %v26 = vld [vmem:[%s1 + $0x50] sm:$0xff]
    %v27 = vld [vmem:[%s1 + $0x58] sm:$0xff]
    %v28 = vld [vmem:[%s1 + $0x60] sm:$0xff]
    %v29 = vld [vmem:[%s1 + $0x68] sm:$0xff]
    %v30 = vld [vmem:[%s1 + $0x70] sm:$0xff]
    %v31 = vld [vmem:[%s1 + $0x78] sm:$0xff]
    %v32 = vld [vmem:[%s2] sm:$0x1]
    %v34 = vperm.slane %v32, 0
    %36 = vmatpush.msra.mxu0 %v31
    %37 = vmatpush.msra.mxu0 %v30
    %38 = vmatpush.msra.mxu0 %v29
    %39 = vmatpush.msra.mxu0 %v28
    %40 = vmatpush.msra.mxu0 %v27
    %41 = vmatpush.msra.mxu0 %v26
    %42 = vmatpush.msra.mxu0 %v25
    %43 = vmatpush.msra.mxu0 %v24
    %44 = vmatpush.msra.mxu0 %v23
    %45 = vmatpush.msra.mxu0 %v22
    %46 = vmatpush.msra.mxu0 %v21
    %47 = vmatpush.msra.mxu0 %v20
    %48 = vmatpush.msra.mxu0 %v19
    %49 = vmatpush.msra.mxu0 %v18
    %50 = vmatpush.msra.mxu0 %v17
    %51 = vmatpush.msra.mxu0 %v16
    %52 = vmatmul.f32.gmra.mxu0 %v15
    %v53 = vpop.f32.mrf.mxu0
    %v54 = vadd.f32 %v34, %v53
    %55 = vdwg.mxu0
    %v56 = vmax.f32 %v54, 0.0
    %57 = vst [vmem:[#allocation2] sm:$0xff] %v56
    // Predicated region
    $region14: #{tpu_custom_call.1} parent=1 // pred_check
      _
    $region15: #{tpu_custom_call.1} parent=1 // pred_check_branch
      %59 = sbr.rel (0) target = $region17
    $region16: #{tpu_custom_call.1} parent=1 // pred_region
      %61 = vsyncadd [#allocation3], 96
      %s62 = sshll.u32 [#allocation2], 4
      %s63 = int_to_ptr.vmem [resolvable:$true] %s62
      %s64 = sshll.u32 %s3, 4
      %s65 = int_to_ptr.hbm [resolvable:$true] %s64
      %70 = dma.vmem_to_hbm [thread:$0]  %s63, 32, %s65, [#allocation3], 32, 32, 2
    $region17: #{tpu_custom_call.1} parent=1 // pred_fallthru
      _
    // Predicated region
    $region18: #{tpu_custom_call.1} parent=1 // pred_check
      _
    $region19: #{tpu_custom_call.1} parent=1 // pred_check_branch
      %72 = sbr.rel (0) target = $region21
    $region20: #{tpu_custom_call.1} parent=1 // pred_region
      %74 = dma.done [#allocation3], 128
    $region21: #{tpu_custom_call.1} parent=1 // pred_fallthru
      _
    %75 = vsyncpa [#allocation3], 1

</llo_original>
